<compile_context>
chip_gen: v7x
topology: tpu7x:2x2x1
jax: 0.10.0
libtpu: 0.0.40
codegen_flags: <defaults>
</compile_context>

<pallas_src>
import functools

import jax
import jax.numpy as jnp
from jax.experimental import pallas as pl
from jax.experimental.pallas import tpu as pltpu


def _ffn_kernel(x_ref, bits_ref, w1_ref, b1_ref, w2_ref, b2_ref, o_ref,
                *, keep_threshold, inv_keep):
    # ---- linear_1 + ReLU --------------------------------------------------
    h = jnp.dot(x_ref[...], w1_ref[...], preferred_element_type=jnp.float32)
    h = jnp.maximum(h + b1_ref[...], 0.0)              # (TM, H) + (1, H)

    # ---- dropout: one uint32 compare + one select on the (TM, H) tensor ---
    keep = bits_ref[...] >= jnp.uint32(keep_threshold)  # P(keep) = 1 - p
    h = jnp.where(keep, h, 0.0)

    # ---- linear_2 (scale folded onto the smaller (TM, D) result) ----------
    out = jnp.dot(h, w2_ref[...], preferred_element_type=jnp.float32)
    out = out * inv_keep + b2_ref[...]                  # (TM, D) + (1, D)
    o_ref[...] = out.astype(o_ref.dtype)


def feed_forward(x, w1, b1, w2, b2, *, dropout_p=0.1, seed=0, block_m=512):
    """x: (batch, seq, d_model) -> (batch, seq, d_model).  Dropout is applied
    (PyTorch F.dropout training=True semantics, equal in distribution)."""
    B, S, D = x.shape
    H = w1.shape[1]
    N = B * S
    x2d = x.reshape(N, D)

    tm = min(block_m, N)
    grid_m = pl.cdiv(N, tm)

    # One uint32 per hidden activation; each row-tile reads its own slice, so
    # dropout masks are independent across grid steps.
    bits = jax.random.bits(jax.random.PRNGKey(seed), (N, H), dtype=jnp.uint32)

    p = float(dropout_p)
    keep_threshold = min(int(round(p * 2.0 ** 32)), 2 ** 32 - 1) if p > 0.0 else 0
    inv_keep = 1.0 / (1.0 - p) if p > 0.0 else 1.0

    b1_2d = b1.reshape(1, H)
    b2_2d = b2.reshape(1, D)

    kernel = functools.partial(
        _ffn_kernel, keep_threshold=keep_threshold, inv_keep=inv_keep)

    flops = 4 * N * D * H                       # two (N,D,H) matmuls
    bytes_accessed = 4 * (2 * N * D + N * H + 2 * D * H + H + D)

    out2d = pl.pallas_call(
        kernel,
        out_shape=jax.ShapeDtypeStruct((N, D), x.dtype),
        grid=(grid_m,),
        in_specs=[
            pl.BlockSpec((tm, D), lambda i: (i, 0)),   # x rows   (streamed)
            pl.BlockSpec((tm, H), lambda i: (i, 0)),   # rng bits (streamed)
            pl.BlockSpec((D, H), lambda i: (0, 0)),    # w1       (resident)
            pl.BlockSpec((1, H), lambda i: (0, 0)),    # b1       (resident)
            pl.BlockSpec((H, D), lambda i: (0, 0)),    # w2       (resident)
            pl.BlockSpec((1, D), lambda i: (0, 0)),    # b2       (resident)
        ],
        out_specs=pl.BlockSpec((tm, D), lambda i: (i, 0)),
        compiler_params=pltpu.CompilerParams(
            dimension_semantics=("parallel",)),
        cost_estimate=pl.CostEstimate(
            flops=flops, transcendentals=0, bytes_accessed=bytes_accessed),
    )(x2d, bits, w1, b1_2d, w2, b2_2d)

    return out2d.reshape(B, S, D)


def init_params(key, d_model, d_ff):
    """nn.Linear-style U(-1/sqrt(fan_in), 1/sqrt(fan_in)) init; weights stored
    as (in_features, out_features)."""
    h = d_model * d_ff
    k1, k2, k3, k4 = jax.random.split(key, 4)
    bound1 = 1.0 / (d_model ** 0.5)
    bound2 = 1.0 / (h ** 0.5)
    w1 = jax.random.uniform(k1, (d_model, h), jnp.float32, -bound1, bound1)
    b1 = jax.random.uniform(k2, (h,), jnp.float32, -bound1, bound1)
    w2 = jax.random.uniform(k3, (h, d_model), jnp.float32, -bound2, bound2)
    b2 = jax.random.uniform(k4, (d_model,), jnp.float32, -bound2, bound2)
    return w1, b1, w2, b2


def _reference(x, w1, b1, w2, b2, *, dropout_p, seed):
    """Pure-JAX reference using the same dropout bits as the kernel."""
    B, S, D = x.shape
    H = w1.shape[1]
    N = B * S
    bits = jax.random.bits(jax.random.PRNGKey(seed), (N, H), dtype=jnp.uint32)
    p = float(dropout_p)
    thr = min(int(round(p * 2.0 ** 32)), 2 ** 32 - 1) if p > 0.0 else 0
    h = jnp.maximum(x.reshape(N, D) @ w1 + b1, 0.0)
    h = jnp.where(bits >= jnp.uint32(thr), h / (1.0 - p), 0.0)
    return (h @ w2 + b2).reshape(B, S, D)


if __name__ == "__main__":
    key = jax.random.PRNGKey(0)
    k_x, k_p = jax.random.split(key)

    batch, seq, d_model, d_ff = 2, 8, 32, 4
    x = jax.random.normal(k_x, (batch, seq, d_model), dtype=jnp.float32)
    w1, b1, w2, b2 = init_params(k_p, d_model, d_ff)

    out = feed_forward(x, w1, b1, w2, b2, dropout_p=0.1, seed=42)
    jax.block_until_ready(out)

    assert out.shape == (batch, seq, d_model)
    assert out.dtype == x.dtype
    ref = _reference(x, w1, b1, w2, b2, dropout_p=0.1, seed=42)
    assert bool(jnp.all(jnp.isfinite(out)))
    assert bool(jnp.allclose(out, ref, rtol=1e-2, atol=1e-2))
    print("KERNEL_OK")
</pallas_src>

<mosaic_0001>
module attributes {stable_mosaic.version = 11 : i64} {
  func.func @_ffn_kernel(%arg0: i32, %arg1: memref<16x32xf32, #tpu.memory_space<vmem>>, %arg2: memref<16x128xi32, #tpu.memory_space<vmem>>, %arg3: memref<32x128xf32, #tpu.memory_space<vmem>>, %arg4: memref<1x128xf32, #tpu.memory_space<vmem>>, %arg5: memref<128x32xf32, #tpu.memory_space<vmem>>, %arg6: memref<1x32xf32, #tpu.memory_space<vmem>>, %arg7: memref<16x32xf32, #tpu.memory_space<vmem>>) attributes {dimension_semantics = [#tpu.dimension_semantics<parallel>], iteration_bounds = array<i64: 1>, scalar_prefetch = 0 : i64, scratch_operands = 0 : i64, tpu.core_type = #tpu.core_type<tc>, window_params = [{transform_indices = @transform_0, window_bounds = array<i64: 16, 32>}, {transform_indices = @transform_1, window_bounds = array<i64: 16, 128>}, {pipeline_mode = #tpu.pipeline_mode<synchronous>, transform_indices = @transform_2, window_bounds = array<i64: 32, 128>}, {pipeline_mode = #tpu.pipeline_mode<synchronous>, transform_indices = @transform_3, window_bounds = array<i64: 1, 128>}, {pipeline_mode = #tpu.pipeline_mode<synchronous>, transform_indices = @transform_4, window_bounds = array<i64: 128, 32>}, {pipeline_mode = #tpu.pipeline_mode<synchronous>, transform_indices = @transform_5, window_bounds = array<i64: 1, 32>}, {transform_indices = @transform_6, window_bounds = array<i64: 16, 32>}]} {
    %c0 = arith.constant 0 : index
    %c0_0 = arith.constant 0 : index
    %0 = vector.load %arg1[%c0, %c0_0] : memref<16x32xf32, #tpu.memory_space<vmem>>, vector<16x32xf32>
    %c0_1 = arith.constant 0 : index
    %c0_2 = arith.constant 0 : index
    %1 = vector.load %arg3[%c0_1, %c0_2] : memref<32x128xf32, #tpu.memory_space<vmem>>, vector<32x128xf32>
    %cst = arith.constant dense<0.000000e+00> : vector<16x128xf32>
    %2 = tpu.matmul %0, %1, %cst {dimension_numbers = #tpu.dot_dimension_numbers<[1], [0], [0], [1], [0, 0, 1, 1], [], []>} : vector<16x32xf32>, vector<32x128xf32>, vector<16x128xf32> -> vector<16x128xf32>
    %c0_3 = arith.constant 0 : index
    %c0_4 = arith.constant 0 : index
    %3 = vector.load %arg4[%c0_3, %c0_4] : memref<1x128xf32, #tpu.memory_space<vmem>>, vector<1x128xf32>
    %4 = vector.broadcast %3 : vector<1x128xf32> to vector<16x128xf32>
    %5 = arith.addf %2, %4 : vector<16x128xf32>
    %cst_5 = arith.constant 0.000000e+00 : f32
    %6 = vector.broadcast %cst_5 : f32 to vector<16x128xf32>
    %7 = arith.maximumf %5, %6 : vector<16x128xf32>
    %c0_6 = arith.constant 0 : index
    %c0_7 = arith.constant 0 : index
    %8 = vector.load %arg2[%c0_6, %c0_7] : memref<16x128xi32, #tpu.memory_space<vmem>>, vector<16x128xi32>
    %c429496730_i32 = arith.constant 429496730 : i32
    %9 = vector.broadcast %c429496730_i32 : i32 to vector<16x128xi32>
    %10 = arith.cmpi uge, %8, %9 : vector<16x128xi32>
    %cst_8 = arith.constant 0.000000e+00 : f32
    %11 = vector.broadcast %cst_8 : f32 to vector<16x128xf32>
    %12 = arith.select %10, %7, %11 : vector<16x128xi1>, vector<16x128xf32>
    %c0_9 = arith.constant 0 : index
    %c0_10 = arith.constant 0 : index
    %13 = vector.load %arg5[%c0_9, %c0_10] : memref<128x32xf32, #tpu.memory_space<vmem>>, vector<128x32xf32>
    %cst_11 = arith.constant dense<0.000000e+00> : vector<16x32xf32>
    %14 = tpu.matmul %12, %13, %cst_11 {dimension_numbers = #tpu.dot_dimension_numbers<[1], [0], [0], [1], [0, 0, 1, 1], [], []>} : vector<16x128xf32>, vector<128x32xf32>, vector<16x32xf32> -> vector<16x32xf32>
    %cst_12 = arith.constant 1.11111116 : f32
    %15 = vector.broadcast %cst_12 : f32 to vector<16x32xf32>
    %16 = arith.mulf %14, %15 : vector<16x32xf32>
    %c0_13 = arith.constant 0 : index
    %c0_14 = arith.constant 0 : index
    %17 = vector.load %arg6[%c0_13, %c0_14] : memref<1x32xf32, #tpu.memory_space<vmem>>, vector<1x32xf32>
    %18 = vector.broadcast %17 : vector<1x32xf32> to vector<16x32xf32>
    %19 = arith.addf %16, %18 : vector<16x32xf32>
    %c0_15 = arith.constant 0 : index
    %c0_16 = arith.constant 0 : index
    %20 = vector.load %arg7[%c0_15, %c0_16] : memref<16x32xf32, #tpu.memory_space<vmem>>, vector<16x32xf32>
    tpu.vector_store %arg7[%c0_15, %c0_16], %19 {strides = array<i32>} : memref<16x32xf32, #tpu.memory_space<vmem>>, vector<16x32xf32>,
    return
  }
  func.func @transform_0(%arg0: i32) -> (i32, i32) {
    %c0_i32 = arith.constant 0 : i32
    %c0_i32_0 = arith.constant 0 : i32
    return %arg0, %c0_i32 : i32, i32
  }
  func.func @transform_1(%arg0: i32) -> (i32, i32) {
    %c0_i32 = arith.constant 0 : i32
    %c0_i32_0 = arith.constant 0 : i32
    return %arg0, %c0_i32 : i32, i32
  }
  func.func @transform_2(%arg0: i32) -> (i32, i32) {
    %c0_i32 = arith.constant 0 : i32
    %c0_i32_0 = arith.constant 0 : i32
    %c0_i32_1 = arith.constant 0 : i32
    return %c0_i32, %c0_i32_0 : i32, i32
  }
  func.func @transform_3(%arg0: i32) -> (i32, i32) {
    %c0_i32 = arith.constant 0 : i32
    %c0_i32_0 = arith.constant 0 : i32
    %c0_i32_1 = arith.constant 0 : i32
    return %c0_i32, %c0_i32_0 : i32, i32
  }
  func.func @transform_4(%arg0: i32) -> (i32, i32) {
    %c0_i32 = arith.constant 0 : i32
    %c0_i32_0 = arith.constant 0 : i32
    %c0_i32_1 = arith.constant 0 : i32
    return %c0_i32, %c0_i32_0 : i32, i32
  }
  func.func @transform_5(%arg0: i32) -> (i32, i32) {
    %c0_i32 = arith.constant 0 : i32
    %c0_i32_0 = arith.constant 0 : i32
    %c0_i32_1 = arith.constant 0 : i32
    return %c0_i32, %c0_i32_0 : i32, i32
  }
  func.func @transform_6(%arg0: i32) -> (i32, i32) {
    %c0_i32 = arith.constant 0 : i32
    %c0_i32_0 = arith.constant 0 : i32
    return %arg0, %c0_i32 : i32, i32
  }
}

</mosaic_0001>

<llo_original>
// kernel: tpu_custom_call.1
$region0: #{tpu_custom_call.1}
  #allocation0 [shape = 'u32[]', space=smem, size = 0x4, offset = 0x4, fixed_abs, tag = 'smem constant byte address 0x4 - core index']
  #allocation1 [shape = 'u32[144,128]{1,0:T(1,128)}', space=vmem, size = 0x12000, scoped, tag = 'internal scratch']
  %s0 = inlined_call_operand.vmem [shape: f32[16,32], index: 0, kind: input, shape index: {}]
  %s1 = inlined_call_operand.vmem [shape: u32[16,128], index: 1, kind: input, shape index: {}]
  %s2 = inlined_call_operand.vmem [shape: f32[32,128], index: 2, kind: input, shape index: {}]
  %s3 = inlined_call_operand.vmem [shape: f32[1,128], index: 3, kind: input, shape index: {}]
  %s4 = inlined_call_operand.vmem [shape: f32[128,32], index: 4, kind: input, shape index: {}]
  %s5 = inlined_call_operand.vmem [shape: f32[1,32], index: 5, kind: input, shape index: {}]
  %s6 = inlined_call_operand.hbm [shape: f32[16,32], index: 6, kind: output, shape index: {}]
  %s7 = sld [smem:[#allocation0]]
  $region34: #{tpu_custom_call.1} parent=0
    _
  %s9 = ssub.s32 1, %s7
  %s10 = scalar_select 0, %s9, %s7
  $region1: #{tpu_custom_call.1} parent=0
    #allocation2 [shape = 'u8[8192]{0}', space=vmem, size = 0x2000, scoped, tag = 'output window, operand 0, single buffered']
    #allocation3 [shape = 's32[1]{0}', space=sflag, size = 0x4, scoped, tag = 'scoped memory for tpu_custom_call.1']
    %11 = vsyncpa [#allocation3], 0
    // Predicated region
    $region2: #{tpu_custom_call.1} parent=1 // pred_check
      _
    $region3: #{tpu_custom_call.1} parent=1 // pred_check_branch
      %13 = sbr.rel (0) target = $region5
    $region4: #{tpu_custom_call.1} parent=1 // pred_region
      _
    $region5: #{tpu_custom_call.1} parent=1 // pred_fallthru
      _
    // Predicated region
    $region6: #{tpu_custom_call.1} parent=1 // pred_check
      _
    $region7: #{tpu_custom_call.1} parent=1 // pred_check_branch
      %15 = sbr.rel (0) target = $region9
    $region8: #{tpu_custom_call.1} parent=1 // pred_region
      _
    $region9: #{tpu_custom_call.1} parent=1 // pred_fallthru
      _
    // Predicated region
    $region10: #{tpu_custom_call.1} parent=1 // pred_check
      _
    $region11: #{tpu_custom_call.1} parent=1 // pred_check_branch
      %17 = sbr.rel (0) target = $region13
    $region12: #{tpu_custom_call.1} parent=1 // pred_region
      _
    $region13: #{tpu_custom_call.1} parent=1 // pred_fallthru
      _
    // Predicated region
    $region14: #{tpu_custom_call.1} parent=1 // pred_check
      _
    $region15: #{tpu_custom_call.1} parent=1 // pred_check_branch
      %19 = sbr.rel (0) target = $region17
    $region16: #{tpu_custom_call.1} parent=1 // pred_region
      _
    $region17: #{tpu_custom_call.1} parent=1 // pred_fallthru
      _
    // Predicated region
    $region18: #{tpu_custom_call.1} parent=1 // pred_check
      _
    $region19: #{tpu_custom_call.1} parent=1 // pred_check_branch
      %21 = sbr.rel (0) target = $region21
    $region20: #{tpu_custom_call.1} parent=1 // pred_region
      _
    $region21: #{tpu_custom_call.1} parent=1 // pred_fallthru
      _
    // Predicated region
    $region22: #{tpu_custom_call.1} parent=1 // pred_check
      _
    $region23: #{tpu_custom_call.1} parent=1 // pred_check_branch
      %23 = sbr.rel (0) target = $region25
    $region24: #{tpu_custom_call.1} parent=1 // pred_region
      _
    $region25: #{tpu_custom_call.1} parent=1 // pred_fallthru
      _
    %v24 = vld [vmem:[%s0] sm:$0xff]
    %v25 = vld [vmem:[%s0 + $0x8] sm:$0xff]
    %v26 = vld [vmem:[%s2] sm:$0xff]
    %v27 = vld [vmem:[%s2 + $0x8] sm:$0xff]
    %v28 = vld [vmem:[%s2 + $0x10] sm:$0xff]
    %v29 = vld [vmem:[%s2 + $0x18] sm:$0xff]
    %v30 = vld [vmem:[%s3] sm:$0x1]
    %v32 = vlaneseq
    %v33 = vshrl.u32 %v32, 7
    %v34 = vsub.s32 0, %v33
    %v35 = vrot.slane %v30, %v34
    %vm37 = vcmask 261120
    %v39 = vsel %vm37, %v24, 0
    %v42 = vsel %vm37, %v25, 0
    %44 = vmatprep.subr.mxu0 0.0
    %45 = vmatpush1.msra.mxu0 %v26
    %46 = vmatprep.subr.mxu0 0.0
    %47 = vmatpush1.msra.mxu0 %v27
    %48 = vmatprep.subr.mxu0 0.0
    %49 = vmatpush1.msra.mxu0 %v28
    %50 = vmatprep.subr.mxu0 0.0
    %51 = vmatpush1.msra.mxu0 %v29
    %52 = vmatprep.subr.mxu0 0.0
    %53 = vmatpush1.msra.mxu0 0.0
    %54 = vmatprep.subr.mxu0 0.0
    %55 = vmatpush1.msra.mxu0 0.0
    %56 = vmatprep.subr.mxu0 0.0
    %57 = vmatpush1.msra.mxu0 0.0
    %58 = vmatprep.subr.mxu0 0.0
    %59 = vmatpush1.msra.mxu0 0.0
    %60 = vmatprep.subr.mxu0 0.0
    %61 = vmatpush1.msra.mxu0 0.0
    %62 = vmatprep.subr.mxu0 0.0
    %63 = vmatpush1.msra.mxu0 0.0
    %64 = vmatprep.subr.mxu0 0.0
    %65 = vmatpush1.msra.mxu0 0.0
    %66 = vmatprep.subr.mxu0 0.0
    %67 = vmatpush1.msra.mxu0 0.0
    %68 = vmatprep.subr.mxu0 0.0
    %69 = vmatpush1.msra.mxu0 0.0
    %70 = vmatprep.subr.mxu0 0.0
    %71 = vmatpush1.msra.mxu0 0.0
    %72 = vmatprep.subr.mxu0 0.0
    %73 = vmatpush1.msra.mxu0 0.0
    %74 = vmatprep.subr.mxu0 0.0
    %75 = vmatpush1.msra.mxu0 0.0
    %76 = vmatprep.subr.mxu0 0.0
    %77 = vmatpush1.msra.mxu0 0.0
    %78 = vmatprep.subr.mxu0 0.0
    %79 = vmatpush1.msra.mxu0 0.0
    %80 = vmatprep.subr.mxu0 0.0
    %81 = vmatpush1.msra.mxu0 0.0
    %82 = vmatprep.subr.mxu0 0.0
    %83 = vmatpush1.msra.mxu0 0.0
    %84 = vmatprep.subr.mxu0 0.0
    %85 = vmatpush1.msra.mxu0 0.0
    %86 = vmatprep.subr.mxu0 0.0
    %87 = vmatpush1.msra.mxu0 0.0
    %88 = vmatprep.subr.mxu0 0.0
    %89 = vmatpush1.msra.mxu0 0.0
    %90 = vmatprep.subr.mxu0 0.0
    %91 = vmatpush1.msra.mxu0 0.0
    %92 = vmatprep.subr.mxu0 0.0
    %93 = vmatpush1.msra.mxu0 0.0
    %94 = vmatprep.subr.mxu0 0.0
    %95 = vmatpush1.msra.mxu0 0.0
    %96 = vmatprep.subr.mxu0 0.0
    %97 = vmatpush1.msra.mxu0 0.0
    %98 = vmatprep.subr.mxu0 0.0
    %99 = vmatpush1.msra.mxu0 0.0
    %100 = vmatprep.subr.mxu0 0.0
    %101 = vmatpush1.msra.mxu0 0.0
    %102 = vmatprep.subr.mxu0 0.0
    %103 = vmatpush1.msra.mxu0 0.0
    %104 = vmatprep.subr.mxu0 0.0
    %105 = vmatpush1.msra.mxu0 0.0
    %106 = vmatprep.subr.mxu0 0.0
    %107 = vmatpush1.msra.mxu0 0.0
    %108 = vmatprep.mubr.f32.mxu0 0.0
    %109 = vmatmul.mubr.f32.gmra.mrb[0].mxu0 %v39
    %v110 = vpop.f32.mrb[0].mxu0
    %v111 = vadd.f32 %v35, %v110
    %v112 = vpop.f32.mrb[0].mxu0
    %113 = vmatprep.mubr.f32.mxu0 0.0
    %114 = vmatmul.mubr.f32.gmra.mrb[0].mxu0 %v42
    %v115 = vpop.f32.mrb[0].mxu0
    %v116 = vadd.f32 %v35, %v115
    %v117 = vpop.f32.mrb[0].mxu0
    %118 = vdwg.mxu0
    %v119 = vmax.f32 %v111, 0.0
    %v120 = vmax.f32 %v116, 0.0
    %v121 = vld [vmem:[%s1] sm:$0xff]
    %v122 = vld [vmem:[%s1 + $0x8] sm:$0xff]
    %vm123 = vcmp.ge.u32.totalorder %v121, 429496730
    %vm124 = vcmp.ge.u32.totalorder %v122, 429496730
    %v125 = vsel %vm123, %v119, 0.0
    %v126 = vsel %vm124, %v120, 0.0
    %v127 = vld [vmem:[%s4] sm:$0xff]
    %v128 = vld [vmem:[%s4 + $0x8] sm:$0xff]
    %v129 = vld [vmem:[%s4 + $0x10] sm:$0xff]
    %v130 = vld [vmem:[%s4 + $0x18] sm:$0xff]
    %v131 = vld [vmem:[%s4 + $0x20] sm:$0xff]
    %v132 = vld [vmem:[%s4 + $0x28] sm:$0xff]
    %v133 = vld [vmem:[%s4 + $0x30] sm:$0xff]
    %v134 = vld [vmem:[%s4 + $0x38] sm:$0xff]
    %v135 = vld [vmem:[%s4 + $0x40] sm:$0xff]
    %v136 = vld [vmem:[%s4 + $0x48] sm:$0xff]
    %v137 = vld [vmem:[%s4 + $0x50] sm:$0xff]
    %v138 = vld [vmem:[%s4 + $0x58] sm:$0xff]
    %v139 = vld [vmem:[%s4 + $0x60] sm:$0xff]
    %v140 = vld [vmem:[%s4 + $0x68] sm:$0xff]
    %v141 = vld [vmem:[%s4 + $0x70] sm:$0xff]
    %v142 = vld [vmem:[%s4 + $0x78] sm:$0xff]
    %143 = vmatprep.subr.mxu0 0.0
    %144 = vmatpush1.msra.mxu0 %v127
    %145 = vmatprep.subr.mxu0 0.0
    %146 = vmatpush1.msra.mxu0 %v128
    %147 = vmatprep.subr.mxu0 0.0
    %148 = vmatpush1.msra.mxu0 %v129
    %149 = vmatprep.subr.mxu0 0.0
    %150 = vmatpush1.msra.mxu0 %v130
    %151 = vmatprep.subr.mxu0 0.0
    %152 = vmatpush1.msra.mxu0 %v131
    %153 = vmatprep.subr.mxu0 0.0
    %154 = vmatpush1.msra.mxu0 %v132
    %155 = vmatprep.subr.mxu0 0.0
    %156 = vmatpush1.msra.mxu0 %v133
    %157 = vmatprep.subr.mxu0 0.0
    %158 = vmatpush1.msra.mxu0 %v134
    %159 = vmatprep.subr.mxu0 0.0
    %160 = vmatpush1.msra.mxu0 %v135
    %161 = vmatprep.subr.mxu0 0.0
    %162 = vmatpush1.msra.mxu0 %v136
    %163 = vmatprep.subr.mxu0 0.0
    %164 = vmatpush1.msra.mxu0 %v137
    %165 = vmatprep.subr.mxu0 0.0
    %166 = vmatpush1.msra.mxu0 %v138
    %167 = vmatprep.subr.mxu0 0.0
    %168 = vmatpush1.msra.mxu0 %v139
    %169 = vmatprep.subr.mxu0 0.0
    %170 = vmatpush1.msra.mxu0 %v140
    %171 = vmatprep.subr.mxu0 0.0
    %172 = vmatpush1.msra.mxu0 %v141
    %173 = vmatprep.subr.mxu0 0.0
    %174 = vmatpush1.msra.mxu0 %v142
    %175 = vmatprep.subr.mxu0 0.0
    %176 = vmatpush1.msra.mxu0 0.0
    %177 = vmatprep.subr.mxu0 0.0
    %178 = vmatpush1.msra.mxu0 0.0
    %179 = vmatprep.subr.mxu0 0.0
    %180 = vmatpush1.msra.mxu0 0.0
    %181 = vmatprep.subr.mxu0 0.0
    %182 = vmatpush1.msra.mxu0 0.0
    %183 = vmatprep.subr.mxu0 0.0
    %184 = vmatpush1.msra.mxu0 0.0
    %185 = vmatprep.subr.mxu0 0.0
    %186 = vmatpush1.msra.mxu0 0.0
    %187 = vmatprep.subr.mxu0 0.0
    %188 = vmatpush1.msra.mxu0 0.0
    %189 = vmatprep.subr.mxu0 0.0
    %190 = vmatpush1.msra.mxu0 0.0
    %191 = vmatprep.subr.mxu0 0.0
    %192 = vmatpush1.msra.mxu0 0.0
    %193 = vmatprep.subr.mxu0 0.0
    %194 = vmatpush1.msra.mxu0 0.0
    %195 = vmatprep.subr.mxu0 0.0
    %196 = vmatpush1.msra.mxu0 0.0
    %197 = vmatprep.subr.mxu0 0.0
    %198 = vmatpush1.msra.mxu0 0.0
    %199 = vmatprep.subr.mxu0 0.0
    %200 = vmatpush1.msra.mxu0 0.0
    %201 = vmatprep.subr.mxu0 0.0
    %202 = vmatpush1.msra.mxu0 0.0
    %203 = vmatprep.subr.mxu0 0.0
    %204 = vmatpush1.msra.mxu0 0.0
    %205 = vmatprep.subr.mxu0 0.0
    %206 = vmatpush1.msra.mxu0 0.0
    %207 = vmatprep.mubr.f32.mxu0 0.0
    %208 = vmatmul.mubr.f32.gmra.mrb[0].mxu0 %v125
    %v209 = vpop.f32.mrb[0].mxu0
    %v210 = vadd.f32 0.0, %v209
    %v211 = vpop.f32.mrb[0].mxu0
    %212 = vmatprep.mubr.f32.mxu0 0.0
    %213 = vmatmul.mubr.f32.gmra.mrb[0].mxu0 %v126
    %v214 = vpop.f32.mrb[0].mxu0
    %v215 = vadd.f32 0.0, %v214
    %v216 = vpop.f32.mrb[0].mxu0
    %217 = vdwg.mxu0
    %v218 = vmul.f32 %v210, 1.1111112
    %v219 = vmul.f32 %v215, 1.1111112
    %v220 = vld [vmem:[%s5] sm:$0x1]
    %v222 = vlaneseq
    %v223 = vshrl.u32 %v222, 7
    %v224 = vsub.s32 0, %v223
    %v225 = vrot.slane %v220, %v224
    %v227 = vadd.f32 %v218, %v225
    %v228 = vadd.f32 %v219, %v225
    %229 = vst.msk [vmem:[#allocation2] sm:$0xff] %vm37, %v227
    %230 = vst.msk [vmem:[#allocation2 + $0x8] sm:$0xff] %vm37, %v228
    // Predicated region
    $region26: #{tpu_custom_call.1} parent=1 // pred_check
      _
    $region27: #{tpu_custom_call.1} parent=1 // pred_check_branch
      %232 = sbr.rel (0) target = $region29
    $region28: #{tpu_custom_call.1} parent=1 // pred_region
      %s234 = ssub.s32 256, 256
      %235 = vsyncadd [#allocation3], %s234
      %s236 = sshll.u32 [#allocation2], 4
      %s237 = int_to_ptr.vmem [resolvable:$true] %s236
      %242 = dma.vmem_to_hbm [thread:$0]  %s237, 256, %s6, [#allocation3], 128, 128, 8
    $region29: #{tpu_custom_call.1} parent=1 // pred_fallthru
      _
    // Predicated region
    $region30: #{tpu_custom_call.1} parent=1 // pred_check
      _
    $region31: #{tpu_custom_call.1} parent=1 // pred_check_branch
      %244 = sbr.rel (0) target = $region33
    $region32: #{tpu_custom_call.1} parent=1 // pred_region
      %245 = dma.done [#allocation3], 256
    $region33: #{tpu_custom_call.1} parent=1 // pred_fallthru
      _
    %246 = vsyncpa [#allocation3], 1

</llo_original>
